<compile_context>
chip_gen: v6e
topology: v6e:2x2x1
jax: 0.10.0
libtpu: 0.0.40
codegen_flags: <defaults>
</compile_context>

<pallas_src>
import jax
import jax.numpy as jnp
from jax.experimental import pallas as pl
from jax.experimental.pallas import tpu as pltpu


def _round_up(x, m):
    return ((x + m - 1) // m) * m


def gcn_kernel(adj_ref, x_ref, wt_ref, b_ref, o_ref, acc_ref):
    """One (row-tile i, contraction-tile k) grid step."""
    k = pl.program_id(1)

    @pl.when(k == 0)
    def _():
        acc_ref[...] = jnp.zeros_like(acc_ref)

    # Partial product of A @ X on the MXU, f32 accumulation.
    acc_ref[...] += jnp.dot(
        adj_ref[...], x_ref[...], preferred_element_type=jnp.float32
    )

    @pl.when(k == pl.num_programs(1) - 1)
    def _():
        # (A @ X) @ W^T + b, tanh.  W arrives pre-transposed (Fin_pad, Fout_pad)
        # so this is a plain MXU matmul (no in-kernel transpose).
        h = jnp.dot(acc_ref[...], wt_ref[...], preferred_element_type=jnp.float32)
        o_ref[...] = jnp.tanh(h + b_ref[...])


def gcn_layer(adj, x, w, b, *, tm=256, tk=256, input_dtype=jnp.float32):
    """tanh((adj @ x) @ w.T + b) via a tiled Pallas TPU kernel.

    adj: (N, N), x: (N, Fin), w: (Fout, Fin)  (PyTorch Linear layout), b: (Fout,)
    """
    n = adj.shape[0]
    fin = x.shape[1]
    fout = w.shape[0]

    # ---- MXU / lane friendly padded sizes & tiles ---------------------------
    fin_pad = _round_up(fin, 128)
    fout_pad = _round_up(fout, 128)          # lane-dense output slab
    tm = min(tm, _round_up(n, 128))          # node-row tile
    tk = min(tk, _round_up(n, 128))          # contraction tile of A @ X
    n_rows = _round_up(n, tm)
    n_k = _round_up(n, tk)

    # ---- zero padding (exactly preserves results in the [:n, :fout] slice) --
    adj_p = jnp.zeros((n_rows, n_k), input_dtype).at[:n, :n].set(
        adj.astype(input_dtype))
    x_p = jnp.zeros((n_k, fin_pad), input_dtype).at[:n, :fin].set(
        x.astype(input_dtype))
    wt_p = jnp.zeros((fin_pad, fout_pad), jnp.float32).at[:fin, :fout].set(
        w.astype(jnp.float32).T)             # pre-transposed weight
    b_p = jnp.zeros((1, fout_pad), jnp.float32).at[0, :fout].set(
        b.astype(jnp.float32))

    grid = (n_rows // tm, n_k // tk)

    in_bytes = jnp.dtype(input_dtype).itemsize
    # double-buffered adj/x tiles + resident W,b + double-buffered out + scratch
    vmem_need = (
        2 * (tm * tk + tk * fin_pad) * in_bytes
        + 2 * tm * fout_pad * 4
        + fin_pad * fout_pad * 4
        + fout_pad * 4
        + tm * fin_pad * 4
    )
    vmem_limit = int(min(max(vmem_need + (4 << 20), 32 << 20), 48 << 20))

    flops = 2.0 * n_rows * n_k * fin_pad + 2.0 * n_rows * fin_pad * fout_pad
    bytes_accessed = (
        adj_p.size * in_bytes
        + grid[0] * x_p.size * in_bytes      # x tiles re-streamed per row tile
        + wt_p.size * 4
        + b_p.size * 4
        + n_rows * fout_pad * 4
    )

    out_p = pl.pallas_call(
        gcn_kernel,
        out_shape=jax.ShapeDtypeStruct((n_rows, fout_pad), jnp.float32),
        grid_spec=pltpu.PrefetchScalarGridSpec(
            num_scalar_prefetch=0,
            grid=grid,
            in_specs=[
                pl.BlockSpec((tm, tk), lambda i, k: (i, k)),            # adj tile
                pl.BlockSpec((tk, fin_pad), lambda i, k: (k, 0)),       # x tile
                pl.BlockSpec((fin_pad, fout_pad), lambda i, k: (0, 0)),  # W^T pinned
                pl.BlockSpec((1, fout_pad), lambda i, k: (0, 0)),       # bias pinned
            ],
            out_specs=pl.BlockSpec((tm, fout_pad), lambda i, k: (i, 0)),
            scratch_shapes=[pltpu.VMEM((tm, fin_pad), jnp.float32)],
        ),
        compiler_params=pltpu.CompilerParams(
            dimension_semantics=("parallel", "arbitrary"),
            vmem_limit_bytes=vmem_limit,
        ),
        cost_estimate=pl.CostEstimate(
            flops=int(flops),
            transcendentals=int(n_rows * fout_pad),
            bytes_accessed=int(bytes_accessed),
        ),
    )(adj_p, x_p, wt_p, b_p)

    return out_p[:n, :fout]


def reference(adj, x, w, b):
    return jnp.tanh((adj @ x) @ w.T + b)


if __name__ == "__main__":
    # TODO(synk): DGL's sparse message passing is represented here as a dense
    # adjacency matmul (O(N^2) memory); a true sparse gather/scatter kernel is
    # a different design.
    key = jax.random.PRNGKey(0)
    k_adj, k_x, k_w, k_b = jax.random.split(key, 4)

    # --- small case matching the module spec (in_feats=32, out_feats=8) ------
    n_nodes, in_feats, out_feats = 16, 32, 8
    adj = (jax.random.uniform(k_adj, (n_nodes, n_nodes)) < 0.3).astype(jnp.float32)
    x = jax.random.normal(k_x, (n_nodes, in_feats), dtype=jnp.float32)
    bound = 1.0 / (in_feats ** 0.5)
    w = jax.random.uniform(k_w, (out_feats, in_feats), minval=-bound, maxval=bound,
                           dtype=jnp.float32)
    b = jax.random.uniform(k_b, (out_feats,), minval=-bound, maxval=bound,
                           dtype=jnp.float32)

    out = jax.block_until_ready(gcn_layer(adj, x, w, b))
    ref = reference(adj, x, w, b)
    assert out.shape == (n_nodes, out_feats)
    assert jnp.allclose(out, ref, atol=1e-5, rtol=1e-5)

    # --- larger case that actually exercises the (row, k) grid tiling --------
    n2, fin2, fout2 = 384, 160, 96
    k2 = jax.random.split(jax.random.PRNGKey(1), 4)
    adj2 = (jax.random.uniform(k2[0], (n2, n2)) < 0.05).astype(jnp.float32)
    x2 = jax.random.normal(k2[1], (n2, fin2), dtype=jnp.float32)
    bound2 = 1.0 / (fin2 ** 0.5)
    w2 = jax.random.uniform(k2[2], (fout2, fin2), minval=-bound2, maxval=bound2,
                            dtype=jnp.float32)
    b2 = jax.random.uniform(k2[3], (fout2,), minval=-bound2, maxval=bound2,
                            dtype=jnp.float32)

    ref2 = reference(adj2, x2, w2, b2)

    out2 = jax.block_until_ready(gcn_layer(adj2, x2, w2, b2, tm=128, tk=128))
    assert out2.shape == (n2, fout2)
    assert jnp.allclose(out2, ref2, atol=1e-4, rtol=1e-4)

    # --- bf16 streaming path (adj/x in bf16, f32 accumulation) ---------------
    out2_bf16 = jax.block_until_ready(
        gcn_layer(adj2, x2, w2, b2, tm=128, tk=128, input_dtype=jnp.bfloat16))
    assert jnp.allclose(out2_bf16, ref2, atol=5e-2, rtol=5e-2)

    print("KERNEL_OK")
</pallas_src>

<mosaic_0001>
module attributes {stable_mosaic.version = 11 : i64} {
  func.func @gcn_kernel(%arg0: i32, %arg1: i32, %arg2: memref<128x128xf32, #tpu.memory_space<vmem>>, %arg3: memref<128x128xf32, #tpu.memory_space<vmem>>, %arg4: memref<128x128xf32, #tpu.memory_space<vmem>>, %arg5: memref<1x128xf32, #tpu.memory_space<vmem>>, %arg6: memref<128x128xf32, #tpu.memory_space<vmem>>, %arg7: memref<128x128xf32, #tpu.memory_space<vmem>>) attributes {dimension_semantics = [#tpu.dimension_semantics<parallel>, #tpu.dimension_semantics<arbitrary>], iteration_bounds = array<i64: 1, 1>, scalar_prefetch = 0 : i64, scratch_operands = 1 : i64, tpu.core_type = #tpu.core_type<tc>, window_params = [{transform_indices = @transform_0, window_bounds = array<i64: 128, 128>}, {transform_indices = @transform_1, window_bounds = array<i64: 128, 128>}, {pipeline_mode = #tpu.pipeline_mode<synchronous>, transform_indices = @transform_2, window_bounds = array<i64: 128, 128>}, {pipeline_mode = #tpu.pipeline_mode<synchronous>, transform_indices = @transform_3, window_bounds = array<i64: 1, 128>}, {transform_indices = @transform_4, window_bounds = array<i64: 128, 128>}]} {
    %c0_i32 = arith.constant 0 : i32
    %0 = arith.cmpi eq, %arg1, %c0_i32 : i32
    %1 = arith.extui %0 : i1 to i32
    %c0_i32_0 = arith.constant 0 : i32
    %2 = arith.cmpi ne, %1, %c0_i32_0 : i32
    scf.if %2 {
      %cst_10 = arith.constant 0.000000e+00 : f32
      %12 = vector.broadcast %cst_10 : f32 to vector<128x128xf32>
      %c0_11 = arith.constant 0 : index
      %c0_12 = arith.constant 0 : index
      %13 = vector.load %arg7[%c0_11, %c0_12] : memref<128x128xf32, #tpu.memory_space<vmem>>, vector<128x128xf32>
      tpu.vector_store %arg7[%c0_11, %c0_12], %12 {strides = array<i32>} : memref<128x128xf32, #tpu.memory_space<vmem>>, vector<128x128xf32>,
    } else {
    }
    %c0 = arith.constant 0 : index
    %c0_1 = arith.constant 0 : index
    %3 = vector.load %arg7[%c0, %c0_1] : memref<128x128xf32, #tpu.memory_space<vmem>>, vector<128x128xf32>
    %c0_2 = arith.constant 0 : index
    %c0_3 = arith.constant 0 : index
    %4 = vector.load %arg2[%c0_2, %c0_3] : memref<128x128xf32, #tpu.memory_space<vmem>>, vector<128x128xf32>
    %c0_4 = arith.constant 0 : index
    %c0_5 = arith.constant 0 : index
    %5 = vector.load %arg3[%c0_4, %c0_5] : memref<128x128xf32, #tpu.memory_space<vmem>>, vector<128x128xf32>
    %cst = arith.constant dense<0.000000e+00> : vector<128x128xf32>
    %6 = tpu.matmul %4, %5, %cst {dimension_numbers = #tpu.dot_dimension_numbers<[1], [0], [0], [1], [0, 0, 1, 1], [], []>} : vector<128x128xf32>, vector<128x128xf32>, vector<128x128xf32> -> vector<128x128xf32>
    %7 = arith.addf %3, %6 : vector<128x128xf32>
    %c0_6 = arith.constant 0 : index
    %c0_7 = arith.constant 0 : index
    %8 = vector.load %arg7[%c0_6, %c0_7] : memref<128x128xf32, #tpu.memory_space<vmem>>, vector<128x128xf32>
    tpu.vector_store %arg7[%c0_6, %c0_7], %7 {strides = array<i32>} : memref<128x128xf32, #tpu.memory_space<vmem>>, vector<128x128xf32>,
    %c0_i32_8 = arith.constant 0 : i32
    %9 = arith.cmpi eq, %arg1, %c0_i32_8 : i32
    %10 = arith.extui %9 : i1 to i32
    %c0_i32_9 = arith.constant 0 : i32
    %11 = arith.cmpi ne, %10, %c0_i32_9 : i32
    scf.if %11 {
      %c0_10 = arith.constant 0 : index
      %c0_11 = arith.constant 0 : index
      %12 = vector.load %arg7[%c0_10, %c0_11] : memref<128x128xf32, #tpu.memory_space<vmem>>, vector<128x128xf32>
      %c0_12 = arith.constant 0 : index
      %c0_13 = arith.constant 0 : index
      %13 = vector.load %arg4[%c0_12, %c0_13] : memref<128x128xf32, #tpu.memory_space<vmem>>, vector<128x128xf32>
      %cst_14 = arith.constant dense<0.000000e+00> : vector<128x128xf32>
      %14 = tpu.matmul %12, %13, %cst_14 {dimension_numbers = #tpu.dot_dimension_numbers<[1], [0], [0], [1], [0, 0, 1, 1], [], []>} : vector<128x128xf32>, vector<128x128xf32>, vector<128x128xf32> -> vector<128x128xf32>
      %c0_15 = arith.constant 0 : index
      %c0_16 = arith.constant 0 : index
      %15 = vector.load %arg5[%c0_15, %c0_16] : memref<1x128xf32, #tpu.memory_space<vmem>>, vector<1x128xf32>
      %16 = vector.broadcast %15 : vector<1x128xf32> to vector<128x128xf32>
      %17 = arith.addf %14, %16 : vector<128x128xf32>
      %18 = math.tanh %17 : vector<128x128xf32>
      %c0_17 = arith.constant 0 : index
      %c0_18 = arith.constant 0 : index
      %19 = vector.load %arg6[%c0_17, %c0_18] : memref<128x128xf32, #tpu.memory_space<vmem>>, vector<128x128xf32>
      tpu.vector_store %arg6[%c0_17, %c0_18], %18 {strides = array<i32>} : memref<128x128xf32, #tpu.memory_space<vmem>>, vector<128x128xf32>,
    } else {
    }
    return
  }
  func.func @transform_0(%arg0: i32, %arg1: i32) -> (i32, i32) {
    %c0_i32 = arith.constant 0 : i32
    return %arg0, %arg1 : i32, i32
  }
  func.func @transform_1(%arg0: i32, %arg1: i32) -> (i32, i32) {
    %c0_i32 = arith.constant 0 : i32
    %c0_i32_0 = arith.constant 0 : i32
    return %arg1, %c0_i32 : i32, i32
  }
  func.func @transform_2(%arg0: i32, %arg1: i32) -> (i32, i32) {
    %c0_i32 = arith.constant 0 : i32
    %c0_i32_0 = arith.constant 0 : i32
    %c0_i32_1 = arith.constant 0 : i32
    return %c0_i32, %c0_i32_0 : i32, i32
  }
  func.func @transform_3(%arg0: i32, %arg1: i32) -> (i32, i32) {
    %c0_i32 = arith.constant 0 : i32
    %c0_i32_0 = arith.constant 0 : i32
    %c0_i32_1 = arith.constant 0 : i32
    return %c0_i32, %c0_i32_0 : i32, i32
  }
  func.func @transform_4(%arg0: i32, %arg1: i32) -> (i32, i32) {
    %c0_i32 = arith.constant 0 : i32
    %c0_i32_0 = arith.constant 0 : i32
    return %arg0, %c0_i32 : i32, i32
  }
}

</mosaic_0001>

<llo_original>
// kernel: tpu_custom_call.1
$region0: #{tpu_custom_call.1}
  #allocation0 [shape = 'u32[]', space=smem, size = 0x4, offset = 0x4, fixed_abs, tag = 'smem constant byte address 0x4 - core index']
  #allocation1 [shape = 'u32[144,128]{1,0:T(1,128)}', space=vmem, size = 0x12000, scoped, tag = 'internal scratch']
  #allocation2 [shape = 'f32[128,128]{1,0:T(8,128)}', space=vmem, size = 0x10000, scoped, tag = 'scratch operand']
  %s0 = inlined_call_operand.hbm [shape: f32[128,128], index: 0, kind: input, shape index: {}]
  %s1 = inlined_call_operand.hbm [shape: f32[128,128], index: 1, kind: input, shape index: {}]
  %s2 = inlined_call_operand.hbm [shape: f32[128,128], index: 2, kind: input, shape index: {}]
  %s3 = inlined_call_operand.vmem [shape: f32[1,128], index: 3, kind: input, shape index: {}]
  %s4 = inlined_call_operand.hbm [shape: f32[128,128], index: 4, kind: output, shape index: {}]
  %s5 = sld [smem:[#allocation0]]
  $region46: #{tpu_custom_call.1} parent=0
    _
  %s7 = ssub.s32 1, %s5
  %s8 = scalar_select 0, %s7, %s5
  $region1: #{tpu_custom_call.1} parent=0
    #allocation3 [shape = 'u8[65536]{0}', space=vmem, size = 0x10000, scoped, tag = 'input window, operand 0, single buffered']
    #allocation4 [shape = 's32[1]{0}', space=sflag, size = 0x4, scoped, tag = 'scoped memory for tpu_custom_call.1']
    #allocation5 [shape = 's32[1]{0}', space=sflag, size = 0x4, scoped, tag = 'scoped memory for tpu_custom_call.1']
    #allocation6 [shape = 'u8[65536]{0}', space=vmem, size = 0x10000, scoped, tag = 'input window, operand 1, single buffered']
    #allocation7 [shape = 's32[1]{0}', space=sflag, size = 0x4, scoped, tag = 'scoped memory for tpu_custom_call.1']
    #allocation8 [shape = 'u8[65536]{0}', space=vmem, size = 0x10000, scoped, tag = 'input window, operand 2, single buffered']
    #allocation9 [shape = 'u8[65536]{0}', space=vmem, size = 0x10000, scoped, tag = 'output window, operand 0, single buffered']
    %9 = vsyncpa [#allocation4], 0
    %10 = vsyncpa [#allocation7], 0
    %11 = vsyncpa [#allocation5], 0
    // Predicated region
    $region2: #{tpu_custom_call.1} parent=1 // pred_check
      _
    $region3: #{tpu_custom_call.1} parent=1 // pred_check_branch
      %13 = sbr.rel (0) target = $region5
    $region4: #{tpu_custom_call.1} parent=1 // pred_region
      %s15 = ssub.s32 2048, 2048
      %16 = vsyncadd [#allocation4], %s15
      %s17 = sshll.u32 [#allocation3], 4
      %s18 = int_to_ptr.vmem [resolvable:$true] %s17
      %23 = dma.hbm_to_vmem [thread:$0]  %s0, 2048, %s18, [#allocation4], 128, 128, 8
    $region5: #{tpu_custom_call.1} parent=1 // pred_fallthru
      _
    // Predicated region
    $region6: #{tpu_custom_call.1} parent=1 // pred_check
      _
    $region7: #{tpu_custom_call.1} parent=1 // pred_check_branch
      %25 = sbr.rel (0) target = $region9
    $region8: #{tpu_custom_call.1} parent=1 // pred_region
      %s27 = ssub.s32 2048, 2048
      %28 = vsyncadd [#allocation7], %s27
      %s29 = sshll.u32 [#allocation6], 4
      %s30 = int_to_ptr.vmem [resolvable:$true] %s29
      %35 = dma.hbm_to_vmem [thread:$0]  %s1, 2048, %s30, [#allocation7], 128, 128, 8
    $region9: #{tpu_custom_call.1} parent=1 // pred_fallthru
      _
    // Predicated region
    $region10: #{tpu_custom_call.1} parent=1 // pred_check
      _
    $region11: #{tpu_custom_call.1} parent=1 // pred_check_branch
      %37 = sbr.rel (0) target = $region13
    $region12: #{tpu_custom_call.1} parent=1 // pred_region
      %s39 = ssub.s32 2048, 2048
      %40 = vsyncadd [#allocation7], %s39
      %s41 = sshll.u32 [#allocation8], 4
      %s42 = int_to_ptr.vmem [resolvable:$true] %s41
      %47 = dma.hbm_to_vmem [thread:$0]  %s2, 2048, %s42, [#allocation7], 128, 128, 8
    $region13: #{tpu_custom_call.1} parent=1 // pred_fallthru
      _
    // Predicated region
    $region14: #{tpu_custom_call.1} parent=1 // pred_check
      _
    $region15: #{tpu_custom_call.1} parent=1 // pred_check_branch
      %49 = sbr.rel (0) target = $region17
    $region16: #{tpu_custom_call.1} parent=1 // pred_region
      _
    $region17: #{tpu_custom_call.1} parent=1 // pred_fallthru
      _
    // Predicated region
    $region18: #{tpu_custom_call.1} parent=1 // pred_check
      _
    $region19: #{tpu_custom_call.1} parent=1 // pred_check_branch
      %51 = sbr.rel (0) target = $region21
    $region20: #{tpu_custom_call.1} parent=1 // pred_region
      %52 = dma.done [#allocation4], 2048
    $region21: #{tpu_custom_call.1} parent=1 // pred_fallthru
      _
    // Predicated region
    $region22: #{tpu_custom_call.1} parent=1 // pred_check
      _
    $region23: #{tpu_custom_call.1} parent=1 // pred_check_branch
      %54 = sbr.rel (0) target = $region25
    $region24: #{tpu_custom_call.1} parent=1 // pred_region
      %55 = dma.done [#allocation7], 2048
    $region25: #{tpu_custom_call.1} parent=1 // pred_fallthru
      _
    // Predicated region
    $region26: #{tpu_custom_call.1} parent=1 // pred_check
      _
    $region27: #{tpu_custom_call.1} parent=1 // pred_check_branch
      %57 = sbr.rel (0) target = $region29
    $region28: #{tpu_custom_call.1} parent=1 // pred_region
      %58 = dma.done [#allocation7], 2048
    $region29: #{tpu_custom_call.1} parent=1 // pred_fallthru
      _
    %p59 = scmp.eq.s32.totalorder 0, 0
    // Predicated region
    $region30: #{tpu_custom_call.1} parent=1 // pred_check
      %p60 = pneg %p59
    $region31: #{tpu_custom_call.1} parent=1 // pred_check_branch
      %62 = sbr.rel (%p60) target = $region33
    $region32: #{tpu_custom_call.1} parent=1 // pred_region
      %63 = vst [vmem:[#allocation2] sm:$0xff] 0.0
      %64 = vst [vmem:[#allocation2 + $0x8] sm:$0xff] 0.0
      %65 = vst [vmem:[#allocation2 + $0x10] sm:$0xff] 0.0
      %66 = vst [vmem:[#allocation2 + $0x18] sm:$0xff] 0.0
      %67 = vst [vmem:[#allocation2 + $0x20] sm:$0xff] 0.0
      %68 = vst [vmem:[#allocation2 + $0x28] sm:$0xff] 0.0
      %69 = vst [vmem:[#allocation2 + $0x30] sm:$0xff] 0.0
      %70 = vst [vmem:[#allocation2 + $0x38] sm:$0xff] 0.0
      %71 = vst [vmem:[#allocation2 + $0x40] sm:$0xff] 0.0
      %72 = vst [vmem:[#allocation2 + $0x48] sm:$0xff] 0.0
      %73 = vst [vmem:[#allocation2 + $0x50] sm:$0xff] 0.0
      %74 = vst [vmem:[#allocation2 + $0x58] sm:$0xff] 0.0
      %75 = vst [vmem:[#allocation2 + $0x60] sm:$0xff] 0.0
      %76 = vst [vmem:[#allocation2 + $0x68] sm:$0xff] 0.0
      %77 = vst [vmem:[#allocation2 + $0x70] sm:$0xff] 0.0
      %78 = vst [vmem:[#allocation2 + $0x78] sm:$0xff] 0.0
    $region33: #{tpu_custom_call.1} parent=1 // pred_fallthru
      _
    %v79 = vld [vmem:[#allocation2] sm:$0xff]
    %v80 = vld [vmem:[#allocation2 + $0x8] sm:$0xff]
    %v81 = vld [vmem:[#allocation2 + $0x10] sm:$0xff]
    %v82 = vld [vmem:[#allocation2 + $0x18] sm:$0xff]
    %v83 = vld [vmem:[#allocation2 + $0x20] sm:$0xff]
    %v84 = vld [vmem:[#allocation2 + $0x28] sm:$0xff]
    %v85 = vld [vmem:[#allocation2 + $0x30] sm:$0xff]
    %v86 = vld [vmem:[#allocation2 + $0x38] sm:$0xff]
    %v87 = vld [vmem:[#allocation2 + $0x40] sm:$0xff]
    %v88 = vld [vmem:[#allocation2 + $0x48] sm:$0xff]
    %v89 = vld [vmem:[#allocation2 + $0x50] sm:$0xff]
    %v90 = vld [vmem:[#allocation2 + $0x58] sm:$0xff]
    %v91 = vld [vmem:[#allocation2 + $0x60] sm:$0xff]
    %v92 = vld [vmem:[#allocation2 + $0x68] sm:$0xff]
    %v93 = vld [vmem:[#allocation2 + $0x70] sm:$0xff]
    %v94 = vld [vmem:[#allocation2 + $0x78] sm:$0xff]
    %v95 = vld [vmem:[#allocation3] sm:$0xff]
    %v96 = vld [vmem:[#allocation3 + $0x8] sm:$0xff]
    %v97 = vld [vmem:[#allocation3 + $0x10] sm:$0xff]
    %v98 = vld [vmem:[#allocation3 + $0x18] sm:$0xff]
    %v99 = vld [vmem:[#allocation3 + $0x20] sm:$0xff]
    %v100 = vld [vmem:[#allocation3 + $0x28] sm:$0xff]
    %v101 = vld [vmem:[#allocation3 + $0x30] sm:$0xff]
    %v102 = vld [vmem:[#allocation3 + $0x38] sm:$0xff]
    %v103 = vld [vmem:[#allocation3 + $0x40] sm:$0xff]
    %v104 = vld [vmem:[#allocation3 + $0x48] sm:$0xff]
    %v105 = vld [vmem:[#allocation3 + $0x50] sm:$0xff]
    %v106 = vld [vmem:[#allocation3 + $0x58] sm:$0xff]
    %v107 = vld [vmem:[#allocation3 + $0x60] sm:$0xff]
    %v108 = vld [vmem:[#allocation3 + $0x68] sm:$0xff]
    %v109 = vld [vmem:[#allocation3 + $0x70] sm:$0xff]
    %v110 = vld [vmem:[#allocation3 + $0x78] sm:$0xff]
    %v111 = vld [vmem:[#allocation6] sm:$0xff]
    %v112 = vld [vmem:[#allocation6 + $0x8] sm:$0xff]
    %v113 = vld [vmem:[#allocation6 + $0x10] sm:$0xff]
    %v114 = vld [vmem:[#allocation6 + $0x18] sm:$0xff]
    %v115 = vld [vmem:[#allocation6 + $0x20] sm:$0xff]
    %v116 = vld [vmem:[#allocation6 + $0x28] sm:$0xff]
    %v117 = vld [vmem:[#allocation6 + $0x30] sm:$0xff]
    %v118 = vld [vmem:[#allocation6 + $0x38] sm:$0xff]
    %v119 = vld [vmem:[#allocation6 + $0x40] sm:$0xff]
    %v120 = vld [vmem:[#allocation6 + $0x48] sm:$0xff]
    %v121 = vld [vmem:[#allocation6 + $0x50] sm:$0xff]
    %v122 = vld [vmem:[#allocation6 + $0x58] sm:$0xff]
    %v123 = vld [vmem:[#allocation6 + $0x60] sm:$0xff]
    %v124 = vld [vmem:[#allocation6 + $0x68] sm:$0xff]
    %v125 = vld [vmem:[#allocation6 + $0x70] sm:$0xff]
    %v126 = vld [vmem:[#allocation6 + $0x78] sm:$0xff]
    %127 = vmatprep.subr.mxu0 0.0
    %128 = vmatpush1.msra.mxu0 %v126
    %129 = vmatprep.subr.mxu0 0.0
    %130 = vmatpush1.msra.mxu0 %v125
    %131 = vmatprep.subr.mxu0 0.0
    %132 = vmatpush1.msra.mxu0 %v124
    %133 = vmatprep.subr.mxu0 0.0
    %134 = vmatpush1.msra.mxu0 %v123
    %135 = vmatprep.subr.mxu0 0.0
    %136 = vmatpush1.msra.mxu0 %v122
    %137 = vmatprep.subr.mxu0 0.0
    %138 = vmatpush1.msra.mxu0 %v121
    %139 = vmatprep.subr.mxu0 0.0
    %140 = vmatpush1.msra.mxu0 %v120
    %141 = vmatprep.subr.mxu0 0.0
    %142 = vmatpush1.msra.mxu0 %v119
    %143 = vmatprep.subr.mxu0 0.0
    %144 = vmatpush1.msra.mxu0 %v118
    %145 = vmatprep.subr.mxu0 0.0
    %146 = vmatpush1.msra.mxu0 %v117
    %147 = vmatprep.subr.mxu0 0.0
    %148 = vmatpush1.msra.mxu0 %v116
    %149 = vmatprep.subr.mxu0 0.0
    %150 = vmatpush1.msra.mxu0 %v115
    %151 = vmatprep.subr.mxu0 0.0
    %152 = vmatpush1.msra.mxu0 %v114
    %153 = vmatprep.subr.mxu0 0.0
    %154 = vmatpush1.msra.mxu0 %v113
    %155 = vmatprep.subr.mxu0 0.0
    %156 = vmatpush1.msra.mxu0 %v112
    %157 = vmatprep.subr.mxu0 0.0
    %158 = vmatpush1.msra.mxu0 %v111
    %159 = vmatprep.subr.mxu0 0.0
    %160 = vmatpush2.msra.mxu0 0.0
    %161 = vmatprep.subr.mxu0 0.0
    %162 = vmatpush2.msra.mxu0 0.0
    %163 = vmatprep.subr.mxu0 0.0
    %164 = vmatpush2.msra.mxu0 0.0
    %165 = vmatprep.subr.mxu0 0.0
    %166 = vmatpush2.msra.mxu0 0.0
    %167 = vmatprep.subr.mxu0 0.0
    %168 = vmatpush2.msra.mxu0 0.0
    %169 = vmatprep.subr.mxu0 0.0
    %170 = vmatpush2.msra.mxu0 0.0
    %171 = vmatprep.subr.mxu0 0.0
    %172 = vmatpush2.msra.mxu0 0.0
    %173 = vmatprep.subr.mxu0 0.0
    %174 = vmatpush2.msra.mxu0 0.0
    %175 = vmatprep.subr.mxu0 0.0
    %176 = vmatpush2.msra.mxu0 0.0
    %177 = vmatprep.subr.mxu0 0.0
    %178 = vmatpush2.msra.mxu0 0.0
    %179 = vmatprep.subr.mxu0 0.0
    %180 = vmatpush2.msra.mxu0 0.0
    %181 = vmatprep.subr.mxu0 0.0
    %182 = vmatpush2.msra.mxu0 0.0
    %183 = vmatprep.subr.mxu0 0.0
    %184 = vmatpush2.msra.mxu0 0.0
    %185 = vmatprep.subr.mxu0 0.0
    %186 = vmatpush2.msra.mxu0 0.0
    %187 = vmatprep.subr.mxu0 0.0
    %188 = vmatpush2.msra.mxu0 0.0
    %189 = vmatprep.subr.mxu0 0.0
    %190 = vmatpush2.msra.mxu0 0.0
    %191 = vmatprep.mubr.f32.mxu0 0.0
    %192 = vmatmul.mubr.f32.gmra.mxu0 %v95
    %v193 = vpop.f32.mrf.mxu0
    %v194 = vadd.f32 0.0, %v193
    %v195 = vpop.f32.mrf.mxu0
    %196 = vmatprep.mubr.f32.mxu0 0.0
    %197 = vmatmul.mubr.f32.gmra.mxu0 %v96
    %v198 = vpop.f32.mrf.mxu0
    %v199 = vadd.f32 0.0, %v198
    %v200 = vpop.f32.mrf.mxu0
    %201 = vmatprep.mubr.f32.mxu0 0.0
    %202 = vmatmul.mubr.f32.gmra.mxu0 %v97
    %v203 = vpop.f32.mrf.mxu0
    %v204 = vadd.f32 0.0, %v203
    %v205 = vpop.f32.mrf.mxu0
    %206 = vmatprep.mubr.f32.mxu0 0.0
    %207 = vmatmul.mubr.f32.gmra.mxu0 %v98
    %v208 = vpop.f32.mrf.mxu0
    %v209 = vadd.f32 0.0, %v208
    %v210 = vpop.f32.mrf.mxu0
    %211 = vmatprep.mubr.f32.mxu0 0.0
    %212 = vmatmul.mubr.f32.gmra.mxu0 %v99
    %v213 = vpop.f32.mrf.mxu0
    %v214 = vadd.f32 0.0, %v213
    %v215 = vpop.f32.mrf.mxu0
    %216 = vmatprep.mubr.f32.mxu0 0.0
    %217 = vmatmul.mubr.f32.gmra.mxu0 %v100
    %v218 = vpop.f32.mrf.mxu0
    %v219 = vadd.f32 0.0, %v218
    %v220 = vpop.f32.mrf.mxu0
    %221 = vmatprep.mubr.f32.mxu0 0.0
    %222 = vmatmul.mubr.f32.gmra.mxu0 %v101
    %v223 = vpop.f32.mrf.mxu0
    %v224 = vadd.f32 0.0, %v223
    %v225 = vpop.f32.mrf.mxu0
    %226 = vmatprep.mubr.f32.mxu0 0.0
    %227 = vmatmul.mubr.f32.gmra.mxu0 %v102
    %v228 = vpop.f32.mrf.mxu0
    %v229 = vadd.f32 0.0, %v228
    %v230 = vpop.f32.mrf.mxu0
    %231 = vmatprep.mubr.f32.mxu0 0.0
    %232 = vmatmul.mubr.f32.gmra.mxu0 %v103
    %v233 = vpop.f32.mrf.mxu0
    %v234 = vadd.f32 0.0, %v233
    %v235 = vpop.f32.mrf.mxu0
    %236 = vmatprep.mubr.f32.mxu0 0.0
    %237 = vmatmul.mubr.f32.gmra.mxu0 %v104
    %v238 = vpop.f32.mrf.mxu0
    %v239 = vadd.f32 0.0, %v238
    %v240 = vpop.f32.mrf.mxu0
    %241 = vmatprep.mubr.f32.mxu0 0.0
    %242 = vmatmul.mubr.f32.gmra.mxu0 %v105
    %v243 = vpop.f32.mrf.mxu0
    %v244 = vadd.f32 0.0, %v243
    %v245 = vpop.f32.mrf.mxu0
    %246 = vmatprep.mubr.f32.mxu0 0.0
    %247 = vmatmul.mubr.f32.gmra.mxu0 %v106
    %v248 = vpop.f32.mrf.mxu0
    %v249 = vadd.f32 0.0, %v248
    %v250 = vpop.f32.mrf.mxu0
    %251 = vmatprep.mubr.f32.mxu0 0.0
    %252 = vmatmul.mubr.f32.gmra.mxu0 %v107
    %v253 = vpop.f32.mrf.mxu0
    %v254 = vadd.f32 0.0, %v253
    %v255 = vpop.f32.mrf.mxu0
    %256 = vmatprep.mubr.f32.mxu0 0.0
    %257 = vmatmul.mubr.f32.gmra.mxu0 %v108
    %v258 = vpop.f32.mrf.mxu0
    %v259 = vadd.f32 0.0, %v258
    %v260 = vpop.f32.mrf.mxu0
    %261 = vmatprep.mubr.f32.mxu0 0.0
    %262 = vmatmul.mubr.f32.gmra.mxu0 %v109
    %v263 = vpop.f32.mrf.mxu0
    %v264 = vadd.f32 0.0, %v263
    %v265 = vpop.f32.mrf.mxu0
    %266 = vmatprep.mubr.f32.mxu0 0.0
    %267 = vmatmul.mubr.f32.gmra.mxu0 %v110
    %v268 = vpop.f32.mrf.mxu0
    %v269 = vadd.f32 0.0, %v268
    %v270 = vpop.f32.mrf.mxu0
    %271 = vdwg.mxu0
    %v272 = vadd.f32 %v79, %v194
    %v273 = vadd.f32 %v80, %v199
    %v274 = vadd.f32 %v81, %v204
    %v275 = vadd.f32 %v82, %v209
    %v276 = vadd.f32 %v83, %v214
    %v277 = vadd.f32 %v84, %v219
    %v278 = vadd.f32 %v85, %v224
    %v279 = vadd.f32 %v86, %v229
    %v280 = vadd.f32 %v87, %v234
    %v281 = vadd.f32 %v88, %v239
    %v282 = vadd.f32 %v89, %v244
    %v283 = vadd.f32 %v90, %v249
    %v284 = vadd.f32 %v91, %v254
    %v285 = vadd.f32 %v92, %v259
    %v286 = vadd.f32 %v93, %v264
    %v287 = vadd.f32 %v94, %v269
    %288 = vst [vmem:[#allocation2] sm:$0xff] %v272
    %289 = vst [vmem:[#allocation2 + $0x8] sm:$0xff] %v273
    %290 = vst [vmem:[#allocation2 + $0x10] sm:$0xff] %v274
    %291 = vst [vmem:[#allocation2 + $0x18] sm:$0xff] %v275
    %292 = vst [vmem:[#allocation2 + $0x20] sm:$0xff] %v276
    %293 = vst [vmem:[#allocation2 + $0x28] sm:$0xff] %v277
    %294 = vst [vmem:[#allocation2 + $0x30] sm:$0xff] %v278
    %295 = vst [vmem:[#allocation2 + $0x38] sm:$0xff] %v279
    %296 = vst [vmem:[#allocation2 + $0x40] sm:$0xff] %v280
    %297 = vst [vmem:[#allocation2 + $0x48] sm:$0xff] %v281
    %298 = vst [vmem:[#allocation2 + $0x50] sm:$0xff] %v282
    %299 = vst [vmem:[#allocation2 + $0x58] sm:$0xff] %v283
    %300 = vst [vmem:[#allocation2 + $0x60] sm:$0xff] %v284
    %301 = vst [vmem:[#allocation2 + $0x68] sm:$0xff] %v285
    %302 = vst [vmem:[#allocation2 + $0x70] sm:$0xff] %v286
    %303 = vst [vmem:[#allocation2 + $0x78] sm:$0xff] %v287
    // Predicated region
    $region34: #{tpu_custom_call.1} parent=1 // pred_check
      %p304 = pneg %p59
    $region35: #{tpu_custom_call.1} parent=1 // pred_check_branch
      %306 = sbr.rel (%p304) target = $region37
    $region36: #{tpu_custom_call.1} parent=1 // pred_region
      %v307 = vld [vmem:[#allocation2] sm:$0xff]
      %v308 = vld [vmem:[#allocation2 + $0x8] sm:$0xff]
      %v309 = vld [vmem:[#allocation2 + $0x10] sm:$0xff]
      %v310 = vld [vmem:[#allocation2 + $0x18] sm:$0xff]
      %v311 = vld [vmem:[#allocation2 + $0x20] sm:$0xff]
      %v312 = vld [vmem:[#allocation2 + $0x28] sm:$0xff]
      %v313 = vld [vmem:[#allocation2 + $0x30] sm:$0xff]
      %v314 = vld [vmem:[#allocation2 + $0x38] sm:$0xff]
      %v315 = vld [vmem:[#allocation2 + $0x40] sm:$0xff]
      %v316 = vld [vmem:[#allocation2 + $0x48] sm:$0xff]
      %v317 = vld [vmem:[#allocation2 + $0x50] sm:$0xff]
      %v318 = vld [vmem:[#allocation2 + $0x58] sm:$0xff]
      %v319 = vld [vmem:[#allocation2 + $0x60] sm:$0xff]
      %v320 = vld [vmem:[#allocation2 + $0x68] sm:$0xff]
      %v321 = vld [vmem:[#allocation2 + $0x70] sm:$0xff]
      %v322 = vld [vmem:[#allocation2 + $0x78] sm:$0xff]
      %v323 = vld [vmem:[#allocation8] sm:$0xff]
      %v324 = vld [vmem:[#allocation8 + $0x8] sm:$0xff]
      %v325 = vld [vmem:[#allocation8 + $0x10] sm:$0xff]
      %v326 = vld [vmem:[#allocation8 + $0x18] sm:$0xff]
      %v327 = vld [vmem:[#allocation8 + $0x20] sm:$0xff]
      %v328 = vld [vmem:[#allocation8 + $0x28] sm:$0xff]
      %v329 = vld [vmem:[#allocation8 + $0x30] sm:$0xff]
      %v330 = vld [vmem:[#allocation8 + $0x38] sm:$0xff]
      %v331 = vld [vmem:[#allocation8 + $0x40] sm:$0xff]
      %v332 = vld [vmem:[#allocation8 + $0x48] sm:$0xff]
      %v333 = vld [vmem:[#allocation8 + $0x50] sm:$0xff]
      %v334 = vld [vmem:[#allocation8 + $0x58] sm:$0xff]
      %v335 = vld [vmem:[#allocation8 + $0x60] sm:$0xff]
      %v336 = vld [vmem:[#allocation8 + $0x68] sm:$0xff]
      %v337 = vld [vmem:[#allocation8 + $0x70] sm:$0xff]
      %v338 = vld [vmem:[#allocation8 + $0x78] sm:$0xff]
      %v339 = vld [vmem:[%s3] sm:$0x1]
      %v341 = vlaneseq
      %v342 = vshrl.u32 %v341, 7
      %v343 = vsub.s32 0, %v342
      %v344 = vrot.slane %v339, %v343
      %346 = vmatprep.subr.mxu0 0.0
      %347 = vmatpush1.msra.mxu0 %v338
      %348 = vmatprep.subr.mxu0 0.0
      %349 = vmatpush1.msra.mxu0 %v337
      %350 = vmatprep.subr.mxu0 0.0
      %351 = vmatpush1.msra.mxu0 %v336
      %352 = vmatprep.subr.mxu0 0.0
      %353 = vmatpush1.msra.mxu0 %v335
      %354 = vmatprep.subr.mxu0 0.0
      %355 = vmatpush1.msra.mxu0 %v334
      %356 = vmatprep.subr.mxu0 0.0
      %357 = vmatpush1.msra.mxu0 %v333
      %358 = vmatprep.subr.mxu0 0.0
      %359 = vmatpush1.msra.mxu0 %v332
      %360 = vmatprep.subr.mxu0 0.0
      %361 = vmatpush1.msra.mxu0 %v331
      %362 = vmatprep.subr.mxu0 0.0
      %363 = vmatpush1.msra.mxu0 %v330
      %364 = vmatprep.subr.mxu0 0.0
      %365 = vmatpush1.msra.mxu0 %v329
      %366 = vmatprep.subr.mxu0 0.0
      %367 = vmatpush1.msra.mxu0 %v328
      %368 = vmatprep.subr.mxu0 0.0
      %369 = vmatpush1.msra.mxu0 %v327
      %370 = vmatprep.subr.mxu0 0.0
      %371 = vmatpush1.msra.mxu0 %v326
      %372 = vmatprep.subr.mxu0 0.0
      %373 = vmatpush1.msra.mxu0 %v325
      %374 = vmatprep.subr.mxu0 0.0
      %375 = vmatpush1.msra.mxu0 %v324
      %376 = vmatprep.subr.mxu0 0.0
      %377 = vmatpush1.msra.mxu0 %v323
      %378 = vmatprep.subr.mxu0 0.0
      %379 = vmatpush2.msra.mxu0 0.0
      %380 = vmatprep.subr.mxu0 0.0
      %381 = vmatpush2.msra.mxu0 0.0
      %382 = vmatprep.subr.mxu0 0.0
      %383 = vmatpush2.msra.mxu0 0.0
      %384 = vmatprep.subr.mxu0 0.0
      %385 = vmatpush2.msra.mxu0 0.0
      %386 = vmatprep.subr.mxu0 0.0
      %387 = vmatpush2.msra.mxu0 0.0
      %388 = vmatprep.subr.mxu0 0.0
      %389 = vmatpush2.msra.mxu0 0.0
      %390 = vmatprep.subr.mxu0 0.0
      %391 = vmatpush2.msra.mxu0 0.0
      %392 = vmatprep.subr.mxu0 0.0
      %393 = vmatpush2.msra.mxu0 0.0
      %394 = vmatprep.subr.mxu0 0.0
      %395 = vmatpush2.msra.mxu0 0.0
      %396 = vmatprep.subr.mxu0 0.0
      %397 = vmatpush2.msra.mxu0 0.0
      %398 = vmatprep.subr.mxu0 0.0
      %399 = vmatpush2.msra.mxu0 0.0
      %400 = vmatprep.subr.mxu0 0.0
      %401 = vmatpush2.msra.mxu0 0.0
      %402 = vmatprep.subr.mxu0 0.0
      %403 = vmatpush2.msra.mxu0 0.0
      %404 = vmatprep.subr.mxu0 0.0
      %405 = vmatpush2.msra.mxu0 0.0
      %406 = vmatprep.subr.mxu0 0.0
      %407 = vmatpush2.msra.mxu0 0.0
      %408 = vmatprep.subr.mxu0 0.0
      %409 = vmatpush2.msra.mxu0 0.0
      %410 = vmatprep.mubr.f32.mxu0 0.0
      %411 = vmatmul.mubr.f32.gmra.mxu0 %v307
      %v412 = vpop.f32.mrf.mxu0
      %v413 = vadd.f32 %v344, %v412
      %v414 = vpop.f32.mrf.mxu0
      %415 = vmatprep.mubr.f32.mxu0 0.0
      %416 = vmatmul.mubr.f32.gmra.mxu0 %v308
      %v417 = vpop.f32.mrf.mxu0
      %v418 = vadd.f32 %v344, %v417
      %v419 = vpop.f32.mrf.mxu0
      %420 = vmatprep.mubr.f32.mxu0 0.0
      %421 = vmatmul.mubr.f32.gmra.mxu0 %v309
      %v422 = vpop.f32.mrf.mxu0
      %v423 = vadd.f32 %v344, %v422
      %v424 = vpop.f32.mrf.mxu0
      %425 = vmatprep.mubr.f32.mxu0 0.0
      %426 = vmatmul.mubr.f32.gmra.mxu0 %v310
      %v427 = vpop.f32.mrf.mxu0
      %v428 = vadd.f32 %v344, %v427
      %v429 = vpop.f32.mrf.mxu0
      %430 = vmatprep.mubr.f32.mxu0 0.0
      %431 = vmatmul.mubr.f32.gmra.mxu0 %v311
      %v432 = vpop.f32.mrf.mxu0
      %v433 = vadd.f32 %v344, %v432
      %v434 = vpop.f32.mrf.mxu0
      %435 = vmatprep.mubr.f32.mxu0 0.0
      %436 = vmatmul.mubr.f32.gmra.mxu0 %v312
      %v437 = vpop.f32.mrf.mxu0
      %v438 = vadd.f32 %v344, %v437
      %v439 = vpop.f32.mrf.mxu0
      %440 = vmatprep.mubr.f32.mxu0 0.0
      %441 = vmatmul.mubr.f32.gmra.mxu0 %v313
      %v442 = vpop.f32.mrf.mxu0
      %v443 = vadd.f32 %v344, %v442
      %v444 = vpop.f32.mrf.mxu0
      %445 = vmatprep.mubr.f32.mxu0 0.0
      %446 = vmatmul.mubr.f32.gmra.mxu0 %v314
      %v447 = vpop.f32.mrf.mxu0
      %v448 = vadd.f32 %v344, %v447
      %v449 = vpop.f32.mrf.mxu0
      %450 = vmatprep.mubr.f32.mxu0 0.0
      %451 = vmatmul.mubr.f32.gmra.mxu0 %v315
      %v452 = vpop.f32.mrf.mxu0
      %v453 = vadd.f32 %v344, %v452
      %v454 = vpop.f32.mrf.mxu0
      %455 = vmatprep.mubr.f32.mxu0 0.0
      %456 = vmatmul.mubr.f32.gmra.mxu0 %v316
      %v457 = vpop.f32.mrf.mxu0
      %v458 = vadd.f32 %v344, %v457
      %v459 = vpop.f32.mrf.mxu0
      %460 = vmatprep.mubr.f32.mxu0 0.0
      %461 = vmatmul.mubr.f32.gmra.mxu0 %v317
      %v462 = vpop.f32.mrf.mxu0
      %v463 = vadd.f32 %v344, %v462
      %v464 = vpop.f32.mrf.mxu0
      %465 = vmatprep.mubr.f32.mxu0 0.0
      %466 = vmatmul.mubr.f32.gmra.mxu0 %v318
      %v467 = vpop.f32.mrf.mxu0
      %v468 = vadd.f32 %v344, %v467
      %v469 = vpop.f32.mrf.mxu0
      %470 = vmatprep.mubr.f32.mxu0 0.0
      %471 = vmatmul.mubr.f32.gmra.mxu0 %v319
      %v472 = vpop.f32.mrf.mxu0
      %v473 = vadd.f32 %v344, %v472
      %v474 = vpop.f32.mrf.mxu0
      %475 = vmatprep.mubr.f32.mxu0 0.0
      %476 = vmatmul.mubr.f32.gmra.mxu0 %v320
      %v477 = vpop.f32.mrf.mxu0
      %v478 = vadd.f32 %v344, %v477
      %v479 = vpop.f32.mrf.mxu0
      %480 = vmatprep.mubr.f32.mxu0 0.0
      %481 = vmatmul.mubr.f32.gmra.mxu0 %v321
      %v482 = vpop.f32.mrf.mxu0
      %v483 = vadd.f32 %v344, %v482
      %v484 = vpop.f32.mrf.mxu0
      %485 = vmatprep.mubr.f32.mxu0 0.0
      %486 = vmatmul.mubr.f32.gmra.mxu0 %v322
      %v487 = vpop.f32.mrf.mxu0
      %v488 = vadd.f32 %v344, %v487
      %v489 = vpop.f32.mrf.mxu0
      %490 = vdwg.mxu0
      %v491 = vtanh.pop %v413
      %v492 = vtanh.pop %v418
      %v493 = vtanh.pop %v423
      %v494 = vtanh.pop %v428
      %v495 = vtanh.pop %v433
      %v496 = vtanh.pop %v438
      %v497 = vtanh.pop %v443
      %v498 = vtanh.pop %v448
      %v499 = vtanh.pop %v453
      %v500 = vtanh.pop %v458
      %v501 = vtanh.pop %v463
      %v502 = vtanh.pop %v468
      %v503 = vtanh.pop %v473
      %v504 = vtanh.pop %v478
      %v505 = vtanh.pop %v483
      %v506 = vtanh.pop %v488
      %507 = vst [vmem:[#allocation9] sm:$0xff] %v491
      %508 = vst [vmem:[#allocation9 + $0x8] sm:$0xff] %v492
      %509 = vst [vmem:[#allocation9 + $0x10] sm:$0xff] %v493
      %510 = vst [vmem:[#allocation9 + $0x18] sm:$0xff] %v494
      %511 = vst [vmem:[#allocation9 + $0x20] sm:$0xff] %v495
      %512 = vst [vmem:[#allocation9 + $0x28] sm:$0xff] %v496
      %513 = vst [vmem:[#allocation9 + $0x30] sm:$0xff] %v497
      %514 = vst [vmem:[#allocation9 + $0x38] sm:$0xff] %v498
      %515 = vst [vmem:[#allocation9 + $0x40] sm:$0xff] %v499
      %516 = vst [vmem:[#allocation9 + $0x48] sm:$0xff] %v500
      %517 = vst [vmem:[#allocation9 + $0x50] sm:$0xff] %v501
      %518 = vst [vmem:[#allocation9 + $0x58] sm:$0xff] %v502
      %519 = vst [vmem:[#allocation9 + $0x60] sm:$0xff] %v503
      %520 = vst [vmem:[#allocation9 + $0x68] sm:$0xff] %v504
      %521 = vst [vmem:[#allocation9 + $0x70] sm:$0xff] %v505
      %522 = vst [vmem:[#allocation9 + $0x78] sm:$0xff] %v506
    $region37: #{tpu_custom_call.1} parent=1 // pred_fallthru
      _
    // Predicated region
    $region38: #{tpu_custom_call.1} parent=1 // pred_check
      _
    $region39: #{tpu_custom_call.1} parent=1 // pred_check_branch
      %524 = sbr.rel (0) target = $region41
    $region40: #{tpu_custom_call.1} parent=1 // pred_region
      %s526 = ssub.s32 2048, 2048
      %527 = vsyncadd [#allocation5], %s526
      %s528 = sshll.u32 [#allocation9], 4
      %s529 = int_to_ptr.vmem [resolvable:$true] %s528
      %534 = dma.vmem_to_hbm [thread:$0]  %s529, 2048, %s4, [#allocation5], 128, 128, 8
    $region41: #{tpu_custom_call.1} parent=1 // pred_fallthru
      _
    // Predicated region
    $region42: #{tpu_custom_call.1} parent=1 // pred_check
      _
    $region43: #{tpu_custom_call.1} parent=1 // pred_check_branch
      %536 = sbr.rel (0) target = $region45
    $region44: #{tpu_custom_call.1} parent=1 // pred_region
      %537 = dma.done [#allocation5], 2048
    $region45: #{tpu_custom_call.1} parent=1 // pred_fallthru
      _
    %538 = vsyncpa [#allocation4], 1
    %539 = vsyncpa [#allocation7], 1
    %540 = vsyncpa [#allocation5], 1

</llo_original>
